<compile_context>
chip_gen: v6e
topology: v6e:2x2x1
jax: 0.10.0
libtpu: 0.0.40
codegen_flags: <defaults>
</compile_context>

<pallas_src>
import functools

import jax
import jax.numpy as jnp
from jax import lax
from jax.experimental import pallas as pl
from jax.experimental.pallas import tpu as pltpu

LANE = 128
SUBLANE = 8


def _round_up(x, m):
    return ((x + m - 1) // m) * m


def conhead_kernel(x_ref,
                   w1_ref, b1_ref,
                   w2_ref, b2_ref,
                   w3_ref, b3_ref,
                   w4_ref, b4_ref,
                   w5_ref, b5_ref,
                   o_ref):
    """One batch tile: 5 chained matmuls (bf16 MXU inputs, f32 accumulation) + L2 norm."""
    cdt = w1_ref.dtype  # bf16 compute/storage dtype feeding the MXU

    def block(h, w_ref, b_ref, relu=True):
        z = jnp.dot(h, w_ref[...], preferred_element_type=jnp.float32) + b_ref[...]
        if relu:
            # Requantize to bf16 to feed the next MXU op.  Accumulation stays f32;
            # acceptable rounding for a contrastive head (tolerance loosened below).
            z = jnp.maximum(z, 0.0).astype(cdt)
        return z

    # bf16 cast happens on-chip: x arrives as raw f32, no wrapper-side pad/cast pass.
    h = x_ref[...].astype(cdt)
    h = block(h, w1_ref, b1_ref)              # encoder.layer1
    h = block(h, w2_ref, b2_ref)              # encoder.layer2
    h = block(h, w3_ref, b3_ref)              # encoder.layer3
    h = block(h, w4_ref, b4_ref)              # fc[0] (Naive_block)
    z = block(h, w5_ref, b5_ref, relu=False)  # fc[1] (final Linear), stays f32

    # F.normalize(z, dim=1) == z / max(||z||, 1e-12).  Clamping ||z||^2 at 1e-24 is
    # numerically equivalent and uses the EUP rsqrt slot instead of sqrt + divide.
    # Padded output lanes are exactly zero (zero weight cols + zero bias), so they do
    # not perturb the norm.
    sumsq = jnp.sum(z * z, axis=1, keepdims=True)
    inv = lax.rsqrt(jnp.maximum(sumsq, 1e-24))
    o_ref[...] = (z * inv).astype(o_ref.dtype)


def _pick_tile_m(batch, in_dim, x_itemsize, prepared_params):
    """Batch-tile rows: big enough to amortize per-step overhead and hit the DMA knee,
    >=2 grid steps when the batch permits (v7x megacore), under a v7x-safe VMEM budget."""
    rows = _round_up(batch, SUBLANE)
    if rows <= 256:
        return rows  # small/demo batches: a single small tile
    # Multiples of 256 feed the 256-wide v6e/v7x MXU (and are 128-multiples for v5e).
    # Cap at cdiv(batch, 2) rounded up so the grid has >=2 steps for v7x's 2nd core.
    tile = max(256, min(1024, _round_up(-(-batch // 2), 256)))
    # VMEM-aware cap (v7x has only 64 MiB physical).  Per-row cost: double-buffered
    # f32 x + double-buffered bf16 out + f32 intermediate activations; weights/biases
    # are resident (the pipeline still allocates two buffers each).
    w_last, _ = prepared_params[-1]
    out_width = w_last.shape[1]
    resident = 2 * sum(w.size * w.dtype.itemsize + b.size * b.dtype.itemsize
                       for w, b in prepared_params)
    act_width = sum(w.shape[1] for w, _ in prepared_params)
    per_row = 2 * in_dim * x_itemsize + 2 * out_width * 2 + act_width * 4
    budget = 40 * 1024 * 1024 - resident
    if budget > 0:
        fit = (budget // per_row) // 256 * 256
        if fit >= 256:
            tile = min(tile, fit)
    return tile


@functools.partial(jax.jit, static_argnames=("proj_dim", "tile_m"))
def conhead_forward(x, prepared_params, proj_dim, tile_m=None):
    batch, in_dim = x.shape
    (w1, b1), (w2, b2), (w3, b3), (w4, b4), (w5, b5) = prepared_params
    assert w1.shape[0] == in_dim, "prepare_conhead_params keeps layer-1 K == in_dim"
    proj_p = w5.shape[1]

    if tile_m is None:
        tile_m = _pick_tile_m(batch, in_dim, x.dtype.itemsize, prepared_params)
    grid_m = pl.cdiv(batch, tile_m)

    weights = [w1, w2, w3, w4, w5]
    biases = [b1, b2, b3, b4, b5]

    flat = [x]
    # x streams in unpadded; the ragged final batch tile is clipped on writeback and
    # its garbage rows never feed a cross-row reduction (all ops are row-independent).
    in_specs = [pl.BlockSpec((tile_m, in_dim), lambda i: (i, 0))]
    for w, b in zip(weights, biases):
        flat += [w, b]
        # Constant index maps -> weights/biases stay VMEM-resident across grid steps.
        in_specs.append(pl.BlockSpec(w.shape, lambda i: (0, 0)))
        in_specs.append(pl.BlockSpec(b.shape, lambda i: (0, 0)))

    flops = 2 * batch * sum(w.shape[0] * w.shape[1] for w in weights)
    bytes_accessed = (x.size * x.dtype.itemsize
                      + sum(a.size * a.dtype.itemsize for a in weights + biases)
                      + batch * proj_p * 2)

    out = pl.pallas_call(
        conhead_kernel,
        # bf16 output halves writeback; rows are exactly `batch` (no batch padding),
        # features stay lane-padded to 128 (lane-dense store, no masked vst).
        out_shape=jax.ShapeDtypeStruct((batch, proj_p), jnp.bfloat16),
        grid_spec=pltpu.PrefetchScalarGridSpec(
            num_scalar_prefetch=0,
            grid=(grid_m,),
            in_specs=in_specs,
            out_specs=pl.BlockSpec((tile_m, proj_p), lambda i: (i, 0)),
        ),
        compiler_params=pltpu.CompilerParams(
            dimension_semantics=("parallel",),   # megacore sharding over batch tiles (v7x)
            vmem_limit_bytes=48 * 1024 * 1024,   # headroom under v7x's 64 MiB physical VMEM
        ),
        cost_estimate=pl.CostEstimate(
            flops=flops, transcendentals=batch, bytes_accessed=bytes_accessed),
    )(*flat)

    # Only the lane padding of the feature dim is stripped here; a fused downstream
    # consumer could take the padded (batch, 128) array directly and skip this copy.
    return out[:, :proj_dim]


def init_linear(key, in_dim, out_dim):
    """Deterministic uniform init (PyTorch-Linear-style bounds). Weight is (in, out)."""
    kw, kb = jax.random.split(key)
    bound = 1.0 / jnp.sqrt(jnp.float32(in_dim))
    w = jax.random.uniform(kw, (in_dim, out_dim), jnp.float32, -bound, bound)
    b = jax.random.uniform(kb, (1, out_dim), jnp.float32, -bound, bound)
    return w, b


def make_conhead_params(key, in_dim, lat_dim, proj_dim):
    keys = jax.random.split(key, 5)
    return (init_linear(keys[0], in_dim, in_dim // 4),       # encoder.layer1
            init_linear(keys[1], in_dim // 4, in_dim // 8),  # encoder.layer2
            init_linear(keys[2], in_dim // 8, lat_dim),      # encoder.layer3
            init_linear(keys[3], lat_dim, lat_dim),          # fc[0] (Naive_block)
            init_linear(keys[4], lat_dim, proj_dim))         # fc[1] (final Linear)


def prepare_conhead_params(params, compute_dtype=jnp.bfloat16):
    """Cast weights to the bf16 MXU dtype and zero-pad feature dims to 128-lane
    multiples (padding is inert: padded input rows see zero activations, padded output
    columns get zero weight cols + zero bias).  Layer-1's K axis is kept at in_dim so
    raw x can stream into the kernel without a wrapper-side pad pass.  Biases stay f32
    (added to the f32 accumulator)."""
    prepped = []
    for li, (w, b) in enumerate(params):
        kin, kout = w.shape
        kin_p = kin if li == 0 else _round_up(kin, LANE)
        kout_p = _round_up(kout, LANE)
        w_p = jnp.zeros((kin_p, kout_p), compute_dtype).at[:kin, :kout].set(
            w.astype(compute_dtype))
        b_p = jnp.zeros((1, kout_p), jnp.float32).at[:, :kout].set(b.astype(jnp.float32))
        prepped.append((w_p, b_p))
    return tuple(prepped)


def conhead_reference(x, params):
    """Pure-JAX f32 reference matching the PyTorch forward."""
    h = x
    for i, (w, b) in enumerate(params):
        h = h @ w + b
        if i < len(params) - 1:
            h = jnp.maximum(h, 0.0)
    norm = jnp.sqrt(jnp.sum(h * h, axis=1, keepdims=True))
    return h / jnp.maximum(norm, 1e-12)


if __name__ == "__main__":
    # Small shapes consistent with the module: x is (batch, in_dim).
    batch, in_dim, lat_dim, proj_dim = 8, 64, 32, 16

    key = jax.random.PRNGKey(0)
    kx, kp = jax.random.split(key)
    x = jax.random.normal(kx, (batch, in_dim), jnp.float32)
    params = make_conhead_params(kp, in_dim, lat_dim, proj_dim)
    prepared = prepare_conhead_params(params)

    out = conhead_forward(x, prepared, proj_dim=proj_dim)
    out = jax.block_until_ready(out)

    ref = conhead_reference(x, params)
    assert out.shape == (batch, proj_dim)
    # bf16 MXU inputs / bf16 output vs f32 reference -> loosened tolerance.
    assert jnp.allclose(out.astype(jnp.float32), ref, atol=5e-2, rtol=5e-2), \
        "mismatch vs pure-JAX reference"

    print("KERNEL_OK")
</pallas_src>

<mosaic_0001>
module attributes {stable_mosaic.version = 11 : i64} {
  func.func @conhead_kernel(%arg0: i32, %arg1: memref<8x64xf32, #tpu.memory_space<vmem>>, %arg2: memref<64x128xbf16, #tpu.memory_space<vmem>>, %arg3: memref<1x128xf32, #tpu.memory_space<vmem>>, %arg4: memref<128x128xbf16, #tpu.memory_space<vmem>>, %arg5: memref<1x128xf32, #tpu.memory_space<vmem>>, %arg6: memref<128x128xbf16, #tpu.memory_space<vmem>>, %arg7: memref<1x128xf32, #tpu.memory_space<vmem>>, %arg8: memref<128x128xbf16, #tpu.memory_space<vmem>>, %arg9: memref<1x128xf32, #tpu.memory_space<vmem>>, %arg10: memref<128x128xbf16, #tpu.memory_space<vmem>>, %arg11: memref<1x128xf32, #tpu.memory_space<vmem>>, %arg12: memref<8x128xbf16, #tpu.memory_space<vmem>>) attributes {dimension_semantics = [#tpu.dimension_semantics<parallel>], iteration_bounds = array<i64: 1>, scalar_prefetch = 0 : i64, scratch_operands = 0 : i64, tpu.core_type = #tpu.core_type<tc>, window_params = [{transform_indices = @transform_0, window_bounds = array<i64: 8, 64>}, {pipeline_mode = #tpu.pipeline_mode<synchronous>, transform_indices = @transform_1, window_bounds = array<i64: 64, 128>}, {pipeline_mode = #tpu.pipeline_mode<synchronous>, transform_indices = @transform_2, window_bounds = array<i64: 1, 128>}, {pipeline_mode = #tpu.pipeline_mode<synchronous>, transform_indices = @transform_3, window_bounds = array<i64: 128, 128>}, {pipeline_mode = #tpu.pipeline_mode<synchronous>, transform_indices = @transform_4, window_bounds = array<i64: 1, 128>}, {pipeline_mode = #tpu.pipeline_mode<synchronous>, transform_indices = @transform_5, window_bounds = array<i64: 128, 128>}, {pipeline_mode = #tpu.pipeline_mode<synchronous>, transform_indices = @transform_6, window_bounds = array<i64: 1, 128>}, {pipeline_mode = #tpu.pipeline_mode<synchronous>, transform_indices = @transform_7, window_bounds = array<i64: 128, 128>}, {pipeline_mode = #tpu.pipeline_mode<synchronous>, transform_indices = @transform_8, window_bounds = array<i64: 1, 128>}, {pipeline_mode = #tpu.pipeline_mode<synchronous>, transform_indices = @transform_9, window_bounds = array<i64: 128, 128>}, {pipeline_mode = #tpu.pipeline_mode<synchronous>, transform_indices = @transform_10, window_bounds = array<i64: 1, 128>}, {transform_indices = @transform_11, window_bounds = array<i64: 8, 128>}]} {
    %c0 = arith.constant 0 : index
    %c0_0 = arith.constant 0 : index
    %0 = vector.load %arg1[%c0, %c0_0] : memref<8x64xf32, #tpu.memory_space<vmem>>, vector<8x64xf32>
    %1 = arith.truncf %0 : vector<8x64xf32> to vector<8x64xbf16>
    %c0_1 = arith.constant 0 : index
    %c0_2 = arith.constant 0 : index
    %2 = vector.load %arg2[%c0_1, %c0_2] : memref<64x128xbf16, #tpu.memory_space<vmem>>, vector<64x128xbf16>
    %cst = arith.constant dense<0.000000e+00> : vector<8x128xf32>
    %3 = tpu.matmul %1, %2, %cst {dimension_numbers = #tpu.dot_dimension_numbers<[1], [0], [0], [1], [0, 0, 1, 1], [], []>} : vector<8x64xbf16>, vector<64x128xbf16>, vector<8x128xf32> -> vector<8x128xf32>
    %c0_3 = arith.constant 0 : index
    %c0_4 = arith.constant 0 : index
    %4 = vector.load %arg3[%c0_3, %c0_4] : memref<1x128xf32, #tpu.memory_space<vmem>>, vector<1x128xf32>
    %5 = vector.broadcast %4 : vector<1x128xf32> to vector<8x128xf32>
    %6 = arith.addf %3, %5 : vector<8x128xf32>
    %cst_5 = arith.constant 0.000000e+00 : f32
    %7 = vector.broadcast %cst_5 : f32 to vector<8x128xf32>
    %8 = arith.maximumf %6, %7 : vector<8x128xf32>
    %9 = arith.truncf %8 : vector<8x128xf32> to vector<8x128xbf16>
    %c0_6 = arith.constant 0 : index
    %c0_7 = arith.constant 0 : index
    %10 = vector.load %arg4[%c0_6, %c0_7] : memref<128x128xbf16, #tpu.memory_space<vmem>>, vector<128x128xbf16>
    %cst_8 = arith.constant dense<0.000000e+00> : vector<8x128xf32>
    %11 = tpu.matmul %9, %10, %cst_8 {dimension_numbers = #tpu.dot_dimension_numbers<[1], [0], [0], [1], [0, 0, 1, 1], [], []>} : vector<8x128xbf16>, vector<128x128xbf16>, vector<8x128xf32> -> vector<8x128xf32>
    %c0_9 = arith.constant 0 : index
    %c0_10 = arith.constant 0 : index
    %12 = vector.load %arg5[%c0_9, %c0_10] : memref<1x128xf32, #tpu.memory_space<vmem>>, vector<1x128xf32>
    %13 = vector.broadcast %12 : vector<1x128xf32> to vector<8x128xf32>
    %14 = arith.addf %11, %13 : vector<8x128xf32>
    %cst_11 = arith.constant 0.000000e+00 : f32
    %15 = vector.broadcast %cst_11 : f32 to vector<8x128xf32>
    %16 = arith.maximumf %14, %15 : vector<8x128xf32>
    %17 = arith.truncf %16 : vector<8x128xf32> to vector<8x128xbf16>
    %c0_12 = arith.constant 0 : index
    %c0_13 = arith.constant 0 : index
    %18 = vector.load %arg6[%c0_12, %c0_13] : memref<128x128xbf16, #tpu.memory_space<vmem>>, vector<128x128xbf16>
    %cst_14 = arith.constant dense<0.000000e+00> : vector<8x128xf32>
    %19 = tpu.matmul %17, %18, %cst_14 {dimension_numbers = #tpu.dot_dimension_numbers<[1], [0], [0], [1], [0, 0, 1, 1], [], []>} : vector<8x128xbf16>, vector<128x128xbf16>, vector<8x128xf32> -> vector<8x128xf32>
    %c0_15 = arith.constant 0 : index
    %c0_16 = arith.constant 0 : index
    %20 = vector.load %arg7[%c0_15, %c0_16] : memref<1x128xf32, #tpu.memory_space<vmem>>, vector<1x128xf32>
    %21 = vector.broadcast %20 : vector<1x128xf32> to vector<8x128xf32>
    %22 = arith.addf %19, %21 : vector<8x128xf32>
    %cst_17 = arith.constant 0.000000e+00 : f32
    %23 = vector.broadcast %cst_17 : f32 to vector<8x128xf32>
    %24 = arith.maximumf %22, %23 : vector<8x128xf32>
    %25 = arith.truncf %24 : vector<8x128xf32> to vector<8x128xbf16>
    %c0_18 = arith.constant 0 : index
    %c0_19 = arith.constant 0 : index
    %26 = vector.load %arg8[%c0_18, %c0_19] : memref<128x128xbf16, #tpu.memory_space<vmem>>, vector<128x128xbf16>
    %cst_20 = arith.constant dense<0.000000e+00> : vector<8x128xf32>
    %27 = tpu.matmul %25, %26, %cst_20 {dimension_numbers = #tpu.dot_dimension_numbers<[1], [0], [0], [1], [0, 0, 1, 1], [], []>} : vector<8x128xbf16>, vector<128x128xbf16>, vector<8x128xf32> -> vector<8x128xf32>
    %c0_21 = arith.constant 0 : index
    %c0_22 = arith.constant 0 : index
    %28 = vector.load %arg9[%c0_21, %c0_22] : memref<1x128xf32, #tpu.memory_space<vmem>>, vector<1x128xf32>
    %29 = vector.broadcast %28 : vector<1x128xf32> to vector<8x128xf32>
    %30 = arith.addf %27, %29 : vector<8x128xf32>
    %cst_23 = arith.constant 0.000000e+00 : f32
    %31 = vector.broadcast %cst_23 : f32 to vector<8x128xf32>
    %32 = arith.maximumf %30, %31 : vector<8x128xf32>
    %33 = arith.truncf %32 : vector<8x128xf32> to vector<8x128xbf16>
    %c0_24 = arith.constant 0 : index
    %c0_25 = arith.constant 0 : index
    %34 = vector.load %arg10[%c0_24, %c0_25] : memref<128x128xbf16, #tpu.memory_space<vmem>>, vector<128x128xbf16>
    %cst_26 = arith.constant dense<0.000000e+00> : vector<8x128xf32>
    %35 = tpu.matmul %33, %34, %cst_26 {dimension_numbers = #tpu.dot_dimension_numbers<[1], [0], [0], [1], [0, 0, 1, 1], [], []>} : vector<8x128xbf16>, vector<128x128xbf16>, vector<8x128xf32> -> vector<8x128xf32>
    %c0_27 = arith.constant 0 : index
    %c0_28 = arith.constant 0 : index
    %36 = vector.load %arg11[%c0_27, %c0_28] : memref<1x128xf32, #tpu.memory_space<vmem>>, vector<1x128xf32>
    %37 = vector.broadcast %36 : vector<1x128xf32> to vector<8x128xf32>
    %38 = arith.addf %35, %37 : vector<8x128xf32>
    %39 = arith.mulf %38, %38 : vector<8x128xf32>
    %cst_29 = arith.constant dense<0.000000e+00> : vector<8xf32>
    %40 = vector.multi_reduction <add>, %39, %cst_29 [1] : vector<8x128xf32> to vector<8xf32>
    %41 = vector.shape_cast %40 : vector<8xf32> to vector<8x1xf32>
    %cst_30 = arith.constant 1.000000e-24 : f32
    %42 = vector.broadcast %cst_30 : f32 to vector<8x1xf32>
    %43 = arith.maximumf %41, %42 : vector<8x1xf32>
    %44 = math.rsqrt %43 : vector<8x1xf32>
    %45 = vector.broadcast %44 : vector<8x1xf32> to vector<8x128xf32>
    %46 = arith.mulf %38, %45 : vector<8x128xf32>
    %47 = arith.truncf %46 : vector<8x128xf32> to vector<8x128xbf16>
    %c0_31 = arith.constant 0 : index
    %c0_32 = arith.constant 0 : index
    %48 = vector.load %arg12[%c0_31, %c0_32] : memref<8x128xbf16, #tpu.memory_space<vmem>>, vector<8x128xbf16>
    tpu.vector_store %arg12[%c0_31, %c0_32], %47 {strides = array<i32>} : memref<8x128xbf16, #tpu.memory_space<vmem>>, vector<8x128xbf16>,
    return
  }
  func.func @transform_0(%arg0: i32) -> (i32, i32) {
    %c0_i32 = arith.constant 0 : i32
    %c0_i32_0 = arith.constant 0 : i32
    return %arg0, %c0_i32 : i32, i32
  }
  func.func @transform_1(%arg0: i32) -> (i32, i32) {
    %c0_i32 = arith.constant 0 : i32
    %c0_i32_0 = arith.constant 0 : i32
    %c0_i32_1 = arith.constant 0 : i32
    return %c0_i32, %c0_i32_0 : i32, i32
  }
  func.func @transform_2(%arg0: i32) -> (i32, i32) {
    %c0_i32 = arith.constant 0 : i32
    %c0_i32_0 = arith.constant 0 : i32
    %c0_i32_1 = arith.constant 0 : i32
    return %c0_i32, %c0_i32_0 : i32, i32
  }
  func.func @transform_3(%arg0: i32) -> (i32, i32) {
    %c0_i32 = arith.constant 0 : i32
    %c0_i32_0 = arith.constant 0 : i32
    %c0_i32_1 = arith.constant 0 : i32
    return %c0_i32, %c0_i32_0 : i32, i32
  }
  func.func @transform_4(%arg0: i32) -> (i32, i32) {
    %c0_i32 = arith.constant 0 : i32
    %c0_i32_0 = arith.constant 0 : i32
    %c0_i32_1 = arith.constant 0 : i32
    return %c0_i32, %c0_i32_0 : i32, i32
  }
  func.func @transform_5(%arg0: i32) -> (i32, i32) {
    %c0_i32 = arith.constant 0 : i32
    %c0_i32_0 = arith.constant 0 : i32
    %c0_i32_1 = arith.constant 0 : i32
    return %c0_i32, %c0_i32_0 : i32, i32
  }
  func.func @transform_6(%arg0: i32) -> (i32, i32) {
    %c0_i32 = arith.constant 0 : i32
    %c0_i32_0 = arith.constant 0 : i32
    %c0_i32_1 = arith.constant 0 : i32
    return %c0_i32, %c0_i32_0 : i32, i32
  }
  func.func @transform_7(%arg0: i32) -> (i32, i32) {
    %c0_i32 = arith.constant 0 : i32
    %c0_i32_0 = arith.constant 0 : i32
    %c0_i32_1 = arith.constant 0 : i32
    return %c0_i32, %c0_i32_0 : i32, i32
  }
  func.func @transform_8(%arg0: i32) -> (i32, i32) {
    %c0_i32 = arith.constant 0 : i32
    %c0_i32_0 = arith.constant 0 : i32
    %c0_i32_1 = arith.constant 0 : i32
    return %c0_i32, %c0_i32_0 : i32, i32
  }
  func.func @transform_9(%arg0: i32) -> (i32, i32) {
    %c0_i32 = arith.constant 0 : i32
    %c0_i32_0 = arith.constant 0 : i32
    %c0_i32_1 = arith.constant 0 : i32
    return %c0_i32, %c0_i32_0 : i32, i32
  }
  func.func @transform_10(%arg0: i32) -> (i32, i32) {
    %c0_i32 = arith.constant 0 : i32
    %c0_i32_0 = arith.constant 0 : i32
    %c0_i32_1 = arith.constant 0 : i32
    return %c0_i32, %c0_i32_0 : i32, i32
  }
  func.func @transform_11(%arg0: i32) -> (i32, i32) {
    %c0_i32 = arith.constant 0 : i32
    %c0_i32_0 = arith.constant 0 : i32
    return %arg0, %c0_i32 : i32, i32
  }
}

</mosaic_0001>

<llo_original>
// kernel: conhead_forward.1
$region0: #{conhead_forward.1}
  #allocation0 [shape = 'u32[]', space=smem, size = 0x4, offset = 0x4, fixed_abs, tag = 'smem constant byte address 0x4 - core index']
  #allocation1 [shape = 'u32[144,128]{1,0:T(1,128)}', space=vmem, size = 0x12000, scoped, tag = 'internal scratch']
  %s0 = inlined_call_operand.hbm [shape: f32[8,64], index: 0, kind: input, shape index: {}]
  %s1 = inlined_call_operand.hbm [shape: bf16[64,128], index: 1, kind: input, shape index: {}]
  %s2 = inlined_call_operand.vmem [shape: f32[1,128], index: 2, kind: input, shape index: {}]
  %s3 = inlined_call_operand.hbm [shape: bf16[128,128], index: 3, kind: input, shape index: {}]
  %s4 = inlined_call_operand.vmem [shape: f32[1,128], index: 4, kind: input, shape index: {}]
  %s5 = inlined_call_operand.hbm [shape: bf16[128,128], index: 5, kind: input, shape index: {}]
  %s6 = inlined_call_operand.vmem [shape: f32[1,128], index: 6, kind: input, shape index: {}]
  %s7 = inlined_call_operand.hbm [shape: bf16[128,128], index: 7, kind: input, shape index: {}]
  %s8 = inlined_call_operand.vmem [shape: f32[1,128], index: 8, kind: input, shape index: {}]
  %s9 = inlined_call_operand.hbm [shape: bf16[128,128], index: 9, kind: input, shape index: {}]
  %s10 = inlined_call_operand.vmem [shape: f32[1,128], index: 10, kind: input, shape index: {}]
  %s11 = inlined_call_operand.hbm [shape: bf16[8,128], index: 11, kind: output, shape index: {}]
  %s12 = sld [smem:[#allocation0]]
  $region78: #{conhead_forward.1} parent=0
    _
  %s14 = ssub.s32 1, %s12
  %s15 = scalar_select 0, %s14, %s12
  $region1: #{conhead_forward.1} parent=0
    #allocation2 [shape = 'u8[4096]{0}', space=vmem, size = 0x1000, scoped, tag = 'input window, operand 0, single buffered']
    #allocation3 [shape = 's32[1]{0}', space=sflag, size = 0x4, scoped, tag = 'scoped memory for conhead_forward.1']
    #allocation4 [shape = 's32[1]{0}', space=sflag, size = 0x4, scoped, tag = 'scoped memory for conhead_forward.1']
    #allocation5 [shape = 'u8[16384]{0}', space=vmem, size = 0x4000, scoped, tag = 'input window, operand 1, single buffered']
    #allocation6 [shape = 's32[1]{0}', space=sflag, size = 0x4, scoped, tag = 'scoped memory for conhead_forward.1']
    #allocation7 [shape = 'u8[32768]{0}', space=vmem, size = 0x8000, scoped, tag = 'input window, operand 3, single buffered']
    #allocation8 [shape = 'u8[32768]{0}', space=vmem, size = 0x8000, scoped, tag = 'input window, operand 5, single buffered']
    #allocation9 [shape = 's32[1]{0}', space=sflag, size = 0x4, scoped, tag = 'scoped memory for conhead_forward.1']
    #allocation10 [shape = 'u8[32768]{0}', space=vmem, size = 0x8000, scoped, tag = 'input window, operand 7, single buffered']
    #allocation11 [shape = 'u8[32768]{0}', space=vmem, size = 0x8000, scoped, tag = 'input window, operand 9, single buffered']
    #allocation12 [shape = 's32[1]{0}', space=sflag, size = 0x4, scoped, tag = 'scoped memory for conhead_forward.1']
    #allocation13 [shape = 'u8[2048]{0}', space=vmem, size = 0x800, scoped, tag = 'output window, operand 0, single buffered']
    %16 = vsyncpa [#allocation3], 0
    %17 = vsyncpa [#allocation6], 0
    %18 = vsyncpa [#allocation9], 0
    %19 = vsyncpa [#allocation12], 0
    %20 = vsyncpa [#allocation4], 0
    // Predicated region
    $region2: #{conhead_forward.1} parent=1 // pred_check
      _
    $region3: #{conhead_forward.1} parent=1 // pred_check_branch
      %22 = sbr.rel (0) target = $region5
    $region4: #{conhead_forward.1} parent=1 // pred_region
      %s24 = ssub.s32 128, 128
      %25 = vsyncadd [#allocation3], %s24
      %s27 = sshll.u32 [#allocation2], 4
      %s28 = int_to_ptr.vmem [resolvable:$true] %s27
      %30 = dma.hbm_to_vmem [thread:$0]  %s0, 128, %s28, [#allocation3]
    $region5: #{conhead_forward.1} parent=1 // pred_fallthru
      _
    // Predicated region
    $region6: #{conhead_forward.1} parent=1 // pred_check
      _
    $region7: #{conhead_forward.1} parent=1 // pred_check_branch
      %32 = sbr.rel (0) target = $region9
    $region8: #{conhead_forward.1} parent=1 // pred_region
      %s34 = ssub.s32 512, 512
      %35 = vsyncadd [#allocation6], %s34
      %s36 = sshll.u32 [#allocation5], 4
      %s37 = int_to_ptr.vmem [resolvable:$true] %s36
      %42 = dma.hbm_to_vmem [thread:$0]  %s1, 512, %s37, [#allocation6], 64, 64, 4
    $region9: #{conhead_forward.1} parent=1 // pred_fallthru
      _
    // Predicated region
    $region10: #{conhead_forward.1} parent=1 // pred_check
      _
    $region11: #{conhead_forward.1} parent=1 // pred_check_branch
      %44 = sbr.rel (0) target = $region13
    $region12: #{conhead_forward.1} parent=1 // pred_region
      _
    $region13: #{conhead_forward.1} parent=1 // pred_fallthru
      _
    // Predicated region
    $region14: #{conhead_forward.1} parent=1 // pred_check
      _
    $region15: #{conhead_forward.1} parent=1 // pred_check_branch
      %46 = sbr.rel (0) target = $region17
    $region16: #{conhead_forward.1} parent=1 // pred_region
      %s48 = ssub.s32 1024, 1024
      %49 = vsyncadd [#allocation6], %s48
      %s50 = sshll.u32 [#allocation7], 4
      %s51 = int_to_ptr.vmem [resolvable:$true] %s50
      %56 = dma.hbm_to_vmem [thread:$0]  %s3, 1024, %s51, [#allocation6], 64, 64, 4
    $region17: #{conhead_forward.1} parent=1 // pred_fallthru
      _
    // Predicated region
    $region18: #{conhead_forward.1} parent=1 // pred_check
      _
    $region19: #{conhead_forward.1} parent=1 // pred_check_branch
      %58 = sbr.rel (0) target = $region21
    $region20: #{conhead_forward.1} parent=1 // pred_region
      _
    $region21: #{conhead_forward.1} parent=1 // pred_fallthru
      _
    // Predicated region
    $region22: #{conhead_forward.1} parent=1 // pred_check
      _
    $region23: #{conhead_forward.1} parent=1 // pred_check_branch
      %60 = sbr.rel (0) target = $region25
    $region24: #{conhead_forward.1} parent=1 // pred_region
      %s62 = ssub.s32 1024, 1024
      %63 = vsyncadd [#allocation9], %s62
      %s64 = sshll.u32 [#allocation8], 4
      %s65 = int_to_ptr.vmem [resolvable:$true] %s64
      %70 = dma.hbm_to_vmem [thread:$0]  %s5, 1024, %s65, [#allocation9], 64, 64, 4
    $region25: #{conhead_forward.1} parent=1 // pred_fallthru
      _
    // Predicated region
    $region26: #{conhead_forward.1} parent=1 // pred_check
      _
    $region27: #{conhead_forward.1} parent=1 // pred_check_branch
      %72 = sbr.rel (0) target = $region29
    $region28: #{conhead_forward.1} parent=1 // pred_region
      _
    $region29: #{conhead_forward.1} parent=1 // pred_fallthru
      _
    // Predicated region
    $region30: #{conhead_forward.1} parent=1 // pred_check
      _
    $region31: #{conhead_forward.1} parent=1 // pred_check_branch
      %74 = sbr.rel (0) target = $region33
    $region32: #{conhead_forward.1} parent=1 // pred_region
      %s76 = ssub.s32 1024, 1024
      %77 = vsyncadd [#allocation9], %s76
      %s78 = sshll.u32 [#allocation10], 4
      %s79 = int_to_ptr.vmem [resolvable:$true] %s78
      %84 = dma.hbm_to_vmem [thread:$0]  %s7, 1024, %s79, [#allocation9], 64, 64, 4
    $region33: #{conhead_forward.1} parent=1 // pred_fallthru
      _
    // Predicated region
    $region34: #{conhead_forward.1} parent=1 // pred_check
      _
    $region35: #{conhead_forward.1} parent=1 // pred_check_branch
      %86 = sbr.rel (0) target = $region37
    $region36: #{conhead_forward.1} parent=1 // pred_region
      _
    $region37: #{conhead_forward.1} parent=1 // pred_fallthru
      _
    // Predicated region
    $region38: #{conhead_forward.1} parent=1 // pred_check
      _
    $region39: #{conhead_forward.1} parent=1 // pred_check_branch
      %88 = sbr.rel (0) target = $region41
    $region40: #{conhead_forward.1} parent=1 // pred_region
      %s90 = ssub.s32 1024, 1024
      %91 = vsyncadd [#allocation12], %s90
      %s92 = sshll.u32 [#allocation11], 4
      %s93 = int_to_ptr.vmem [resolvable:$true] %s92
      %98 = dma.hbm_to_vmem [thread:$0]  %s9, 1024, %s93, [#allocation12], 64, 64, 4
    $region41: #{conhead_forward.1} parent=1 // pred_fallthru
      _
    // Predicated region
    $region42: #{conhead_forward.1} parent=1 // pred_check
      _
    $region43: #{conhead_forward.1} parent=1 // pred_check_branch
      %100 = sbr.rel (0) target = $region45
    $region44: #{conhead_forward.1} parent=1 // pred_region
      _
    $region45: #{conhead_forward.1} parent=1 // pred_fallthru
      _
    // Predicated region
    $region46: #{conhead_forward.1} parent=1 // pred_check
      _
    $region47: #{conhead_forward.1} parent=1 // pred_check_branch
      %102 = sbr.rel (0) target = $region49
    $region48: #{conhead_forward.1} parent=1 // pred_region
      %103 = dma.done [#allocation3], 128
    $region49: #{conhead_forward.1} parent=1 // pred_fallthru
      _
    // Predicated region
    $region50: #{conhead_forward.1} parent=1 // pred_check
      _
    $region51: #{conhead_forward.1} parent=1 // pred_check_branch
      %105 = sbr.rel (0) target = $region53
    $region52: #{conhead_forward.1} parent=1 // pred_region
      %106 = dma.done [#allocation6], 512
    $region53: #{conhead_forward.1} parent=1 // pred_fallthru
      _
    // Predicated region
    $region54: #{conhead_forward.1} parent=1 // pred_check
      _
    $region55: #{conhead_forward.1} parent=1 // pred_check_branch
      %108 = sbr.rel (0) target = $region57
    $region56: #{conhead_forward.1} parent=1 // pred_region
      %109 = dma.done [#allocation6], 1024
    $region57: #{conhead_forward.1} parent=1 // pred_fallthru
      _
    // Predicated region
    $region58: #{conhead_forward.1} parent=1 // pred_check
      _
    $region59: #{conhead_forward.1} parent=1 // pred_check_branch
      %111 = sbr.rel (0) target = $region61
    $region60: #{conhead_forward.1} parent=1 // pred_region
      %112 = dma.done [#allocation9], 1024
    $region61: #{conhead_forward.1} parent=1 // pred_fallthru
      _
    // Predicated region
    $region62: #{conhead_forward.1} parent=1 // pred_check
      _
    $region63: #{conhead_forward.1} parent=1 // pred_check_branch
      %114 = sbr.rel (0) target = $region65
    $region64: #{conhead_forward.1} parent=1 // pred_region
      %115 = dma.done [#allocation9], 1024
    $region65: #{conhead_forward.1} parent=1 // pred_fallthru
      _
    // Predicated region
    $region66: #{conhead_forward.1} parent=1 // pred_check
      _
    $region67: #{conhead_forward.1} parent=1 // pred_check_branch
      %117 = sbr.rel (0) target = $region69
    $region68: #{conhead_forward.1} parent=1 // pred_region
      %118 = dma.done [#allocation12], 1024
    $region69: #{conhead_forward.1} parent=1 // pred_fallthru
      _
    %v120 = vld [vmem:[#allocation2] sm:$0xff]
    %v121 = vpack.c.bf16 %v120, %v120
    %v122 = vld [vmem:[#allocation5] sm:$0xf]
    %v123 = vld [vmem:[#allocation5 + $0x4] sm:$0xf]
    %v124 = vld [vmem:[#allocation5 + $0x8] sm:$0xf]
    %v125 = vld [vmem:[#allocation5 + $0xc] sm:$0xf]
    %v126 = vld [vmem:[#allocation5 + $0x10] sm:$0xf]
    %v127 = vld [vmem:[#allocation5 + $0x14] sm:$0xf]
    %v128 = vld [vmem:[#allocation5 + $0x18] sm:$0xf]
    %v129 = vld [vmem:[#allocation5 + $0x1c] sm:$0xf]
    %v130 = vld [vmem:[%s2] sm:$0x1]
    %v132 = vlaneseq
    %v133 = vshrl.u32 %v132, 7
    %v134 = vsub.s32 0, %v133
    %v135 = vrot.slane %v130, %v134
    %v145 = vunpack.c.l.b16 %v122
    %v146 = vunpack.c.l.b16 %v123
    %v147 = vunpack.c.l.b16 %v124
    %v148 = vunpack.c.l.b16 %v125
    %v149 = vunpack.c.l.b16 %v126
    %v150 = vunpack.c.l.b16 %v127
    %v151 = vunpack.c.l.b16 %v128
    %v152 = vunpack.c.l.b16 %v129
    %v153 = vpack.c.b16 %v146, %v145
    %v154 = vpack.c.b16 %v148, %v147
    %v155 = vpack.c.b16 %v150, %v149
    %v156 = vpack.c.b16 %v152, %v151
    %vm161 = vcmask 523264
    %v163 = vsel %vm161, %v121, 0
    %165 = vmatprep.subr.bf16.mxu0 0
    %166 = vmatpush1.bf16.msra.mxu0 0
    %167 = vmatprep.subr.bf16.mxu0 0
    %168 = vmatpush1.bf16.msra.mxu0 0
    %169 = vmatprep.subr.bf16.mxu0 0
    %170 = vmatpush1.bf16.msra.mxu0 0
    %171 = vmatprep.subr.bf16.mxu0 0
    %172 = vmatpush1.bf16.msra.mxu0 0
    %173 = vmatprep.subr.bf16.mxu0 0
    %174 = vmatpush1.bf16.msra.mxu0 %v156
    %175 = vmatprep.subr.bf16.mxu0 0
    %176 = vmatpush1.bf16.msra.mxu0 %v155
    %177 = vmatprep.subr.bf16.mxu0 0
    %178 = vmatpush1.bf16.msra.mxu0 %v154
    %179 = vmatprep.subr.bf16.mxu0 0
    %180 = vmatpush1.bf16.msra.mxu0 %v153
    %181 = vmatprep.subr.bf16.mxu0 0
    %182 = vmatpush2.bf16.msra.mxu0 0
    %183 = vmatprep.subr.bf16.mxu0 0
    %184 = vmatpush2.bf16.msra.mxu0 0
    %185 = vmatprep.subr.bf16.mxu0 0
    %186 = vmatpush2.bf16.msra.mxu0 0
    %187 = vmatprep.subr.bf16.mxu0 0
    %188 = vmatpush2.bf16.msra.mxu0 0
    %189 = vmatprep.subr.bf16.mxu0 0
    %190 = vmatpush2.bf16.msra.mxu0 0
    %191 = vmatprep.subr.bf16.mxu0 0
    %192 = vmatpush2.bf16.msra.mxu0 0
    %193 = vmatprep.subr.bf16.mxu0 0
    %194 = vmatpush2.bf16.msra.mxu0 0
    %195 = vmatprep.subr.bf16.mxu0 0
    %196 = vmatpush2.bf16.msra.mxu0 0
    %197 = vmatprep.mubr.bf16.mxu0 0
    %198 = vmatmul.mubr.bf16.gmra.mxu0 %v163
    %v199 = vpop.f32.mrf.mxu0
    %v200 = vadd.f32 %v135, %v199
    %v201 = vpop.f32.mrf.mxu0
    %v202 = vpop.f32.mrf.mxu0
    %v203 = vpop.f32.mrf.mxu0
    %204 = vdwg.mxu0
    %v205 = vmax.f32 %v200, 0.0
    %v206 = vpack.c.bf16 %v205, %v205
    %v207 = vld [vmem:[#allocation7] sm:$0xf]
    %v208 = vld [vmem:[#allocation7 + $0x4] sm:$0xf]
    %v209 = vld [vmem:[#allocation7 + $0x8] sm:$0xf]
    %v210 = vld [vmem:[#allocation7 + $0xc] sm:$0xf]
    %v211 = vld [vmem:[#allocation7 + $0x10] sm:$0xf]
    %v212 = vld [vmem:[#allocation7 + $0x14] sm:$0xf]
    %v213 = vld [vmem:[#allocation7 + $0x18] sm:$0xf]
    %v214 = vld [vmem:[#allocation7 + $0x1c] sm:$0xf]
    %v215 = vld [vmem:[#allocation7 + $0x20] sm:$0xf]
    %v216 = vld [vmem:[#allocation7 + $0x24] sm:$0xf]
    %v217 = vld [vmem:[#allocation7 + $0x28] sm:$0xf]
    %v218 = vld [vmem:[#allocation7 + $0x2c] sm:$0xf]
    %v219 = vld [vmem:[#allocation7 + $0x30] sm:$0xf]
    %v220 = vld [vmem:[#allocation7 + $0x34] sm:$0xf]
    %v221 = vld [vmem:[#allocation7 + $0x38] sm:$0xf]
    %v222 = vld [vmem:[#allocation7 + $0x3c] sm:$0xf]
    %v223 = vld [vmem:[%s4] sm:$0x1]
    %v225 = vlaneseq
    %v226 = vshrl.u32 %v225, 7
    %v227 = vsub.s32 0, %v226
    %v228 = vrot.slane %v223, %v227
    %v246 = vunpack.c.l.b16 %v207
    %v247 = vunpack.c.l.b16 %v208
    %v248 = vunpack.c.l.b16 %v209
    %v249 = vunpack.c.l.b16 %v210
    %v250 = vunpack.c.l.b16 %v211
    %v251 = vunpack.c.l.b16 %v212
    %v252 = vunpack.c.l.b16 %v213
    %v253 = vunpack.c.l.b16 %v214
    %v254 = vunpack.c.l.b16 %v215
    %v255 = vunpack.c.l.b16 %v216
    %v256 = vunpack.c.l.b16 %v217
    %v257 = vunpack.c.l.b16 %v218
    %v258 = vunpack.c.l.b16 %v219
    %v259 = vunpack.c.l.b16 %v220
    %v260 = vunpack.c.l.b16 %v221
    %v261 = vunpack.c.l.b16 %v222
    %v262 = vpack.c.b16 %v247, %v246
    %v263 = vpack.c.b16 %v249, %v248
    %v264 = vpack.c.b16 %v251, %v250
    %v265 = vpack.c.b16 %v253, %v252
    %v266 = vpack.c.b16 %v255, %v254
    %v267 = vpack.c.b16 %v257, %v256
    %v268 = vpack.c.b16 %v259, %v258
    %v269 = vpack.c.b16 %v261, %v260
    %278 = vmatprep.subr.bf16.mxu0 0
    %279 = vmatpush1.bf16.msra.mxu0 %v269
    %280 = vmatprep.subr.bf16.mxu0 0
    %281 = vmatpush1.bf16.msra.mxu0 %v268
    %282 = vmatprep.subr.bf16.mxu0 0
    %283 = vmatpush1.bf16.msra.mxu0 %v267
    %284 = vmatprep.subr.bf16.mxu0 0
    %285 = vmatpush1.bf16.msra.mxu0 %v266
    %286 = vmatprep.subr.bf16.mxu0 0
    %287 = vmatpush1.bf16.msra.mxu0 %v265
    %288 = vmatprep.subr.bf16.mxu0 0
    %289 = vmatpush1.bf16.msra.mxu0 %v264
    %290 = vmatprep.subr.bf16.mxu0 0
    %291 = vmatpush1.bf16.msra.mxu0 %v263
    %292 = vmatprep.subr.bf16.mxu0 0
    %293 = vmatpush1.bf16.msra.mxu0 %v262
    %294 = vmatprep.subr.bf16.mxu0 0
    %295 = vmatpush2.bf16.msra.mxu0 0
    %296 = vmatprep.subr.bf16.mxu0 0
    %297 = vmatpush2.bf16.msra.mxu0 0
    %298 = vmatprep.subr.bf16.mxu0 0
    %299 = vmatpush2.bf16.msra.mxu0 0
    %300 = vmatprep.subr.bf16.mxu0 0
    %301 = vmatpush2.bf16.msra.mxu0 0
    %302 = vmatprep.subr.bf16.mxu0 0
    %303 = vmatpush2.bf16.msra.mxu0 0
    %304 = vmatprep.subr.bf16.mxu0 0
    %305 = vmatpush2.bf16.msra.mxu0 0
    %306 = vmatprep.subr.bf16.mxu0 0
    %307 = vmatpush2.bf16.msra.mxu0 0
    %308 = vmatprep.subr.bf16.mxu0 0
    %309 = vmatpush2.bf16.msra.mxu0 0
    %310 = vmatprep.mubr.bf16.mxu0 0
    %311 = vmatmul.mubr.bf16.gmra.mxu0 %v206
    %v312 = vpop.f32.mrf.mxu0
    %v313 = vadd.f32 %v228, %v312
    %v314 = vpop.f32.mrf.mxu0
    %v315 = vpop.f32.mrf.mxu0
    %v316 = vpop.f32.mrf.mxu0
    %317 = vdwg.mxu0
    %v318 = vmax.f32 %v313, 0.0
    %v319 = vpack.c.bf16 %v318, %v318
    %v320 = vld [vmem:[#allocation8] sm:$0xf]
    %v321 = vld [vmem:[#allocation8 + $0x4] sm:$0xf]
    %v322 = vld [vmem:[#allocation8 + $0x8] sm:$0xf]
    %v323 = vld [vmem:[#allocation8 + $0xc] sm:$0xf]
    %v324 = vld [vmem:[#allocation8 + $0x10] sm:$0xf]
    %v325 = vld [vmem:[#allocation8 + $0x14] sm:$0xf]
    %v326 = vld [vmem:[#allocation8 + $0x18] sm:$0xf]
    %v327 = vld [vmem:[#allocation8 + $0x1c] sm:$0xf]
    %v328 = vld [vmem:[#allocation8 + $0x20] sm:$0xf]
    %v329 = vld [vmem:[#allocation8 + $0x24] sm:$0xf]
    %v330 = vld [vmem:[#allocation8 + $0x28] sm:$0xf]
    %v331 = vld [vmem:[#allocation8 + $0x2c] sm:$0xf]
    %v332 = vld [vmem:[#allocation8 + $0x30] sm:$0xf]
    %v333 = vld [vmem:[#allocation8 + $0x34] sm:$0xf]
    %v334 = vld [vmem:[#allocation8 + $0x38] sm:$0xf]
    %v335 = vld [vmem:[#allocation8 + $0x3c] sm:$0xf]
    %v336 = vld [vmem:[%s6] sm:$0x1]
    %v338 = vlaneseq
    %v339 = vshrl.u32 %v338, 7
    %v340 = vsub.s32 0, %v339
    %v341 = vrot.slane %v336, %v340
    %v359 = vunpack.c.l.b16 %v320
    %v360 = vunpack.c.l.b16 %v321
    %v361 = vunpack.c.l.b16 %v322
    %v362 = vunpack.c.l.b16 %v323
    %v363 = vunpack.c.l.b16 %v324
    %v364 = vunpack.c.l.b16 %v325
    %v365 = vunpack.c.l.b16 %v326
    %v366 = vunpack.c.l.b16 %v327
    %v367 = vunpack.c.l.b16 %v328
    %v368 = vunpack.c.l.b16 %v329
    %v369 = vunpack.c.l.b16 %v330
    %v370 = vunpack.c.l.b16 %v331
    %v371 = vunpack.c.l.b16 %v332
    %v372 = vunpack.c.l.b16 %v333
    %v373 = vunpack.c.l.b16 %v334
    %v374 = vunpack.c.l.b16 %v335
    %v375 = vpack.c.b16 %v360, %v359
    %v376 = vpack.c.b16 %v362, %v361
    %v377 = vpack.c.b16 %v364, %v363
    %v378 = vpack.c.b16 %v366, %v365
    %v379 = vpack.c.b16 %v368, %v367
    %v380 = vpack.c.b16 %v370, %v369
    %v381 = vpack.c.b16 %v372, %v371
    %v382 = vpack.c.b16 %v374, %v373
    %391 = vmatprep.subr.bf16.mxu0 0
    %392 = vmatpush1.bf16.msra.mxu0 %v382
    %393 = vmatprep.subr.bf16.mxu0 0
    %394 = vmatpush1.bf16.msra.mxu0 %v381
    %395 = vmatprep.subr.bf16.mxu0 0
    %396 = vmatpush1.bf16.msra.mxu0 %v380
    %397 = vmatprep.subr.bf16.mxu0 0
    %398 = vmatpush1.bf16.msra.mxu0 %v379
    %399 = vmatprep.subr.bf16.mxu0 0
    %400 = vmatpush1.bf16.msra.mxu0 %v378
    %401 = vmatprep.subr.bf16.mxu0 0
    %402 = vmatpush1.bf16.msra.mxu0 %v377
    %403 = vmatprep.subr.bf16.mxu0 0
    %404 = vmatpush1.bf16.msra.mxu0 %v376
    %405 = vmatprep.subr.bf16.mxu0 0
    %406 = vmatpush1.bf16.msra.mxu0 %v375
    %407 = vmatprep.subr.bf16.mxu0 0
    %408 = vmatpush2.bf16.msra.mxu0 0
    %409 = vmatprep.subr.bf16.mxu0 0
    %410 = vmatpush2.bf16.msra.mxu0 0
    %411 = vmatprep.subr.bf16.mxu0 0
    %412 = vmatpush2.bf16.msra.mxu0 0
    %413 = vmatprep.subr.bf16.mxu0 0
    %414 = vmatpush2.bf16.msra.mxu0 0
    %415 = vmatprep.subr.bf16.mxu0 0
    %416 = vmatpush2.bf16.msra.mxu0 0
    %417 = vmatprep.subr.bf16.mxu0 0
    %418 = vmatpush2.bf16.msra.mxu0 0
    %419 = vmatprep.subr.bf16.mxu0 0
    %420 = vmatpush2.bf16.msra.mxu0 0
    %421 = vmatprep.subr.bf16.mxu0 0
    %422 = vmatpush2.bf16.msra.mxu0 0
    %423 = vmatprep.mubr.bf16.mxu0 0
    %424 = vmatmul.mubr.bf16.gmra.mxu0 %v319
    %v425 = vpop.f32.mrf.mxu0
    %v426 = vadd.f32 %v341, %v425
    %v427 = vpop.f32.mrf.mxu0
    %v428 = vpop.f32.mrf.mxu0
    %v429 = vpop.f32.mrf.mxu0
    %430 = vdwg.mxu0
    %v431 = vmax.f32 %v426, 0.0
    %v432 = vpack.c.bf16 %v431, %v431
    %v433 = vld [vmem:[#allocation10] sm:$0xf]
    %v434 = vld [vmem:[#allocation10 + $0x4] sm:$0xf]
    %v435 = vld [vmem:[#allocation10 + $0x8] sm:$0xf]
    %v436 = vld [vmem:[#allocation10 + $0xc] sm:$0xf]
    %v437 = vld [vmem:[#allocation10 + $0x10] sm:$0xf]
    %v438 = vld [vmem:[#allocation10 + $0x14] sm:$0xf]
    %v439 = vld [vmem:[#allocation10 + $0x18] sm:$0xf]
    %v440 = vld [vmem:[#allocation10 + $0x1c] sm:$0xf]
    %v441 = vld [vmem:[#allocation10 + $0x20] sm:$0xf]
    %v442 = vld [vmem:[#allocation10 + $0x24] sm:$0xf]
    %v443 = vld [vmem:[#allocation10 + $0x28] sm:$0xf]
    %v444 = vld [vmem:[#allocation10 + $0x2c] sm:$0xf]
    %v445 = vld [vmem:[#allocation10 + $0x30] sm:$0xf]
    %v446 = vld [vmem:[#allocation10 + $0x34] sm:$0xf]
    %v447 = vld [vmem:[#allocation10 + $0x38] sm:$0xf]
    %v448 = vld [vmem:[#allocation10 + $0x3c] sm:$0xf]
    %v449 = vld [vmem:[%s8] sm:$0x1]
    %v451 = vlaneseq
    %v452 = vshrl.u32 %v451, 7
    %v453 = vsub.s32 0, %v452
    %v454 = vrot.slane %v449, %v453
    %v472 = vunpack.c.l.b16 %v433
    %v473 = vunpack.c.l.b16 %v434
    %v474 = vunpack.c.l.b16 %v435
    %v475 = vunpack.c.l.b16 %v436
    %v476 = vunpack.c.l.b16 %v437
    %v477 = vunpack.c.l.b16 %v438
    %v478 = vunpack.c.l.b16 %v439
    %v479 = vunpack.c.l.b16 %v440
    %v480 = vunpack.c.l.b16 %v441
    %v481 = vunpack.c.l.b16 %v442
    %v482 = vunpack.c.l.b16 %v443
    %v483 = vunpack.c.l.b16 %v444
    %v484 = vunpack.c.l.b16 %v445
    %v485 = vunpack.c.l.b16 %v446
    %v486 = vunpack.c.l.b16 %v447
    %v487 = vunpack.c.l.b16 %v448
    %v488 = vpack.c.b16 %v473, %v472
    %v489 = vpack.c.b16 %v475, %v474
    %v490 = vpack.c.b16 %v477, %v476
    %v491 = vpack.c.b16 %v479, %v478
    %v492 = vpack.c.b16 %v481, %v480
    %v493 = vpack.c.b16 %v483, %v482
    %v494 = vpack.c.b16 %v485, %v484
    %v495 = vpack.c.b16 %v487, %v486
    %504 = vmatprep.subr.bf16.mxu0 0
    %505 = vmatpush1.bf16.msra.mxu0 %v495
    %506 = vmatprep.subr.bf16.mxu0 0
    %507 = vmatpush1.bf16.msra.mxu0 %v494
    %508 = vmatprep.subr.bf16.mxu0 0
    %509 = vmatpush1.bf16.msra.mxu0 %v493
    %510 = vmatprep.subr.bf16.mxu0 0
    %511 = vmatpush1.bf16.msra.mxu0 %v492
    %512 = vmatprep.subr.bf16.mxu0 0
    %513 = vmatpush1.bf16.msra.mxu0 %v491
    %514 = vmatprep.subr.bf16.mxu0 0
    %515 = vmatpush1.bf16.msra.mxu0 %v490
    %516 = vmatprep.subr.bf16.mxu0 0
    %517 = vmatpush1.bf16.msra.mxu0 %v489
    %518 = vmatprep.subr.bf16.mxu0 0
    %519 = vmatpush1.bf16.msra.mxu0 %v488
    %520 = vmatprep.subr.bf16.mxu0 0
    %521 = vmatpush2.bf16.msra.mxu0 0
    %522 = vmatprep.subr.bf16.mxu0 0
    %523 = vmatpush2.bf16.msra.mxu0 0
    %524 = vmatprep.subr.bf16.mxu0 0
    %525 = vmatpush2.bf16.msra.mxu0 0
    %526 = vmatprep.subr.bf16.mxu0 0
    %527 = vmatpush2.bf16.msra.mxu0 0
    %528 = vmatprep.subr.bf16.mxu0 0
    %529 = vmatpush2.bf16.msra.mxu0 0
    %530 = vmatprep.subr.bf16.mxu0 0
    %531 = vmatpush2.bf16.msra.mxu0 0
    %532 = vmatprep.subr.bf16.mxu0 0
    %533 = vmatpush2.bf16.msra.mxu0 0
    %534 = vmatprep.subr.bf16.mxu0 0
    %535 = vmatpush2.bf16.msra.mxu0 0
    %536 = vmatprep.mubr.bf16.mxu0 0
    %537 = vmatmul.mubr.bf16.gmra.mxu0 %v432
    %v538 = vpop.f32.mrf.mxu0
    %v539 = vadd.f32 %v454, %v538
    %v540 = vpop.f32.mrf.mxu0
    %v541 = vpop.f32.mrf.mxu0
    %v542 = vpop.f32.mrf.mxu0
    %543 = vdwg.mxu0
    %v544 = vmax.f32 %v539, 0.0
    %v545 = vpack.c.bf16 %v544, %v544
    %v546 = vld [vmem:[#allocation11] sm:$0xf]
    %v547 = vld [vmem:[#allocation11 + $0x4] sm:$0xf]
    %v548 = vld [vmem:[#allocation11 + $0x8] sm:$0xf]
    %v549 = vld [vmem:[#allocation11 + $0xc] sm:$0xf]
    %v550 = vld [vmem:[#allocation11 + $0x10] sm:$0xf]
    %v551 = vld [vmem:[#allocation11 + $0x14] sm:$0xf]
    %v552 = vld [vmem:[#allocation11 + $0x18] sm:$0xf]
    %v553 = vld [vmem:[#allocation11 + $0x1c] sm:$0xf]
    %v554 = vld [vmem:[#allocation11 + $0x20] sm:$0xf]
    %v555 = vld [vmem:[#allocation11 + $0x24] sm:$0xf]
    %v556 = vld [vmem:[#allocation11 + $0x28] sm:$0xf]
    %v557 = vld [vmem:[#allocation11 + $0x2c] sm:$0xf]
    %v558 = vld [vmem:[#allocation11 + $0x30] sm:$0xf]
    %v559 = vld [vmem:[#allocation11 + $0x34] sm:$0xf]
    %v560 = vld [vmem:[#allocation11 + $0x38] sm:$0xf]
    %v561 = vld [vmem:[#allocation11 + $0x3c] sm:$0xf]
    %v562 = vld [vmem:[%s10] sm:$0x1]
    %v564 = vlaneseq
    %v565 = vshrl.u32 %v564, 7
    %v566 = vsub.s32 0, %v565
    %v567 = vrot.slane %v562, %v566
    %v585 = vunpack.c.l.b16 %v546
    %v586 = vunpack.c.l.b16 %v547
    %v587 = vunpack.c.l.b16 %v548
    %v588 = vunpack.c.l.b16 %v549
    %v589 = vunpack.c.l.b16 %v550
    %v590 = vunpack.c.l.b16 %v551
    %v591 = vunpack.c.l.b16 %v552
    %v592 = vunpack.c.l.b16 %v553
    %v593 = vunpack.c.l.b16 %v554
    %v594 = vunpack.c.l.b16 %v555
    %v595 = vunpack.c.l.b16 %v556
    %v596 = vunpack.c.l.b16 %v557
    %v597 = vunpack.c.l.b16 %v558
    %v598 = vunpack.c.l.b16 %v559
    %v599 = vunpack.c.l.b16 %v560
    %v600 = vunpack.c.l.b16 %v561
    %v601 = vpack.c.b16 %v586, %v585
    %v602 = vpack.c.b16 %v588, %v587
    %v603 = vpack.c.b16 %v590, %v589
    %v604 = vpack.c.b16 %v592, %v591
    %v605 = vpack.c.b16 %v594, %v593
    %v606 = vpack.c.b16 %v596, %v595
    %v607 = vpack.c.b16 %v598, %v597
    %v608 = vpack.c.b16 %v600, %v599
    %617 = vmatprep.subr.bf16.mxu0 0
    %618 = vmatpush1.bf16.msra.mxu0 %v608
    %619 = vmatprep.subr.bf16.mxu0 0
    %620 = vmatpush1.bf16.msra.mxu0 %v607
    %621 = vmatprep.subr.bf16.mxu0 0
    %622 = vmatpush1.bf16.msra.mxu0 %v606
    %623 = vmatprep.subr.bf16.mxu0 0
    %624 = vmatpush1.bf16.msra.mxu0 %v605
    %625 = vmatprep.subr.bf16.mxu0 0
    %626 = vmatpush1.bf16.msra.mxu0 %v604
    %627 = vmatprep.subr.bf16.mxu0 0
    %628 = vmatpush1.bf16.msra.mxu0 %v603
    %629 = vmatprep.subr.bf16.mxu0 0
    %630 = vmatpush1.bf16.msra.mxu0 %v602
    %631 = vmatprep.subr.bf16.mxu0 0
    %632 = vmatpush1.bf16.msra.mxu0 %v601
    %633 = vmatprep.subr.bf16.mxu0 0
    %634 = vmatpush2.bf16.msra.mxu0 0
    %635 = vmatprep.subr.bf16.mxu0 0
    %636 = vmatpush2.bf16.msra.mxu0 0
    %637 = vmatprep.subr.bf16.mxu0 0
    %638 = vmatpush2.bf16.msra.mxu0 0
    %639 = vmatprep.subr.bf16.mxu0 0
    %640 = vmatpush2.bf16.msra.mxu0 0
    %641 = vmatprep.subr.bf16.mxu0 0
    %642 = vmatpush2.bf16.msra.mxu0 0
    %643 = vmatprep.subr.bf16.mxu0 0
    %644 = vmatpush2.bf16.msra.mxu0 0
    %645 = vmatprep.subr.bf16.mxu0 0
    %646 = vmatpush2.bf16.msra.mxu0 0
    %647 = vmatprep.subr.bf16.mxu0 0
    %648 = vmatpush2.bf16.msra.mxu0 0
    %649 = vmatprep.mubr.bf16.mxu0 0
    %650 = vmatmul.mubr.bf16.gmra.mxu0 %v545
    %v651 = vpop.f32.mrf.mxu0
    %v652 = vadd.f32 %v567, %v651
    %v653 = vpop.f32.mrf.mxu0
    %v654 = vpop.f32.mrf.mxu0
    %v655 = vpop.f32.mrf.mxu0
    %656 = vdwg.mxu0
    %v657 = vmul.f32 %v652, %v652
    %658 = vadd.xlane.f32.xlu0 %v657
    %v659 = vpop.xlane.xlu0 %658
    %v660 = vmax.f32 %v659, 1e-24
    %v661 = vrsqrt.pop %v660
    %v662 = vmul.f32 %v652, %v661
    %v663 = vpack.c.bf16 %v662, %v662
    %664 = vst [vmem:[#allocation13] sm:$0xf] %v663
    // Predicated region
    $region70: #{conhead_forward.1} parent=1 // pred_check
      _
    $region71: #{conhead_forward.1} parent=1 // pred_check_branch
      %666 = sbr.rel (0) target = $region73
    $region72: #{conhead_forward.1} parent=1 // pred_region
      %s668 = ssub.s32 64, 64
      %669 = vsyncadd [#allocation4], %s668
      %s671 = sshll.u32 [#allocation13], 4
      %s672 = int_to_ptr.vmem [resolvable:$true] %s671
      %674 = dma.vmem_to_hbm [thread:$0]  %s672, 64, %s11, [#allocation4]
    $region73: #{conhead_forward.1} parent=1 // pred_fallthru
      _
    // Predicated region
    $region74: #{conhead_forward.1} parent=1 // pred_check
      _
    $region75: #{conhead_forward.1} parent=1 // pred_check_branch
      %676 = sbr.rel (0) target = $region77
    $region76: #{conhead_forward.1} parent=1 // pred_region
      %677 = dma.done [#allocation4], 64
    $region77: #{conhead_forward.1} parent=1 // pred_fallthru
      _
    %678 = vsyncpa [#allocation3], 1
    %679 = vsyncpa [#allocation6], 1
    %680 = vsyncpa [#allocation9], 1
    %681 = vsyncpa [#allocation12], 1
    %682 = vsyncpa [#allocation4], 1

</llo_original>
